<compile_context>
chip_gen: v7x
topology: tpu7x:2x2x1
jax: 0.10.0
libtpu: 0.0.40
codegen_flags: <defaults>
</compile_context>

<pallas_src>
import jax
import jax.numpy as jnp
from jax.experimental import pallas as pl
from jax.experimental.pallas import tpu as pltpu

NUM_CLASSES = 26
LANE_WIDTH = 13 * 128                             # lcm(26, 128) = 1664
ROWS_PER_PACKED_ROW = LANE_WIDTH // NUM_CLASSES   # 64 original rows per packed row

_STATIC_WEIGHTS = jnp.array(
    [0.1435, 0.187, 0.1692, 0.1165, 0.1949, 0.1204, 0.1728, 0.1372, 0.162,
     0.154, 0.1987, 0.1057, 0.1482, 0.1192, 0.159, 0.1929, 0.1158, 0.1907,
     0.1345, 0.1307, 0.1665, 0.1698, 0.1797, 0.1657, 0.152, 0.1537],
    dtype=jnp.float32,
)


def _discrete_loss_kernel(pred_ref, target_ref, d2_ref, tsum_ref):
    """One grid step: emit (8, 1664) partial sums of d^2 and of target.

    pred_ref/target_ref: [TILE_R, 1664] lane-dense input tiles (any float dtype).
    d2_ref/tsum_ref:     [1, 8, 1664] per-step partial-sum output blocks.
    """
    p = pred_ref[...].astype(jnp.float32)      # in-kernel upcast (VPU has slack)
    t = target_ref[...].astype(jnp.float32)
    d = p - t
    d2 = d * d
    groups = p.shape[0] // 8
    # Fold the tile's rows into an (8, 1664) partial: splitting the leading dim
    # keeps (8,128) sublane groups intact, so the sum is plain vreg adds.
    d2_ref[0] = jnp.sum(d2.reshape(groups, 8, LANE_WIDTH), axis=0)
    tsum_ref[0] = jnp.sum(t.reshape(groups, 8, LANE_WIDTH), axis=0)


def _round_up(x, m):
    return -(-x // m) * m


def discrete_loss(pred, target, weight_type="mean", *, max_tile_rows=None):
    """Pallas-backed DiscreteLoss(weight_type).forward(pred, target).

    pred, target: [N, 26] float arrays (f32 or bf16). Returns a scalar f32.
    """
    if weight_type not in ("mean", "static", "dynamic"):
        raise ValueError(f"unknown weight_type: {weight_type}")
    assert pred.shape == target.shape
    n, c = pred.shape
    assert c == NUM_CLASSES, f"expected {NUM_CLASSES} classes, got {c}"

    dtype = jnp.result_type(pred.dtype, target.dtype)
    if not jnp.issubdtype(dtype, jnp.floating):
        dtype = jnp.float32
    pred = pred.astype(dtype)
    target = target.astype(dtype)
    itemsize = jnp.dtype(dtype).itemsize
    sublane_align = max(8, 32 // itemsize)        # 8 for f32, 16 for bf16

    # Tile cap: keep 2 inputs x 2 pipeline buffers under ~28 MiB of VMEM.
    pipeline_budget = 28 * 1024 * 1024
    tile_cap = pipeline_budget // (4 * LANE_WIDTH * itemsize)
    tile_cap = max(sublane_align, (tile_cap // sublane_align) * sublane_align)
    if max_tile_rows is not None:
        user_cap = max(sublane_align,
                       (max_tile_rows // sublane_align) * sublane_align)
        tile_cap = min(tile_cap, user_cap)

    # --- single pad + lane-dense repack -------------------------------------
    rows = -(-n // ROWS_PER_PACKED_ROW)                    # packed rows needed
    rows_aligned = _round_up(rows, sublane_align)
    tile_r = rows_aligned if rows_aligned <= tile_cap else tile_cap
    rows_pad = _round_up(rows, tile_r)                     # multiple of tile_r
    n_pad = rows_pad * ROWS_PER_PACKED_ROW
    if n_pad != n:
        # Zero rows: d^2 = 0 and target-sum contribution = 0 -> no effect.
        padding = ((0, n_pad - n), (0, 0))
        pred = jnp.pad(pred, padding)
        target = jnp.pad(target, padding)
    pred_r = pred.reshape(rows_pad, LANE_WIDTH)
    target_r = target.reshape(rows_pad, LANE_WIDTH)

    grid = (rows_pad // tile_r,)

    d2_part, tsum_part = pl.pallas_call(
        _discrete_loss_kernel,
        out_shape=(
            jax.ShapeDtypeStruct((grid[0], 8, LANE_WIDTH), jnp.float32),
            jax.ShapeDtypeStruct((grid[0], 8, LANE_WIDTH), jnp.float32),
        ),
        grid_spec=pltpu.PrefetchScalarGridSpec(
            num_scalar_prefetch=0,
            grid=grid,
            in_specs=[
                pl.BlockSpec((tile_r, LANE_WIDTH), lambda i: (i, 0)),
                pl.BlockSpec((tile_r, LANE_WIDTH), lambda i: (i, 0)),
            ],
            out_specs=[
                pl.BlockSpec((1, 8, LANE_WIDTH), lambda i: (i, 0, 0)),
                pl.BlockSpec((1, 8, LANE_WIDTH), lambda i: (i, 0, 0)),
            ],
        ),
        compiler_params=pltpu.CompilerParams(
            dimension_semantics=("parallel",),     # no cross-step carry
            vmem_limit_bytes=40 * 1024 * 1024,
        ),
    )(pred_r, target_r)

    # --- tiny wrapper-side fold: lane k -> class (k % 26) --------------------
    d2_class = (d2_part.sum(axis=(0, 1))
                .reshape(ROWS_PER_PACKED_ROW, NUM_CLASSES).sum(axis=0))  # (26,)

    if weight_type == "mean":
        w = jnp.full((NUM_CLASSES,), 1.0 / NUM_CLASSES, dtype=jnp.float32)
    elif weight_type == "static":
        w = _STATIC_WEIGHTS
    else:  # dynamic — column stats fused into the kernel (no 2nd HBM pass)
        stats = (tsum_part.sum(axis=(0, 1))
                 .reshape(ROWS_PER_PACKED_ROW, NUM_CLASSES).sum(axis=0))
        w = jnp.where(stats != 0.0, 1.0 / jnp.log(stats + 1.2),
                      jnp.float32(1e-4))

    return jnp.dot(w, d2_class)


def _reference_loss(pred, target, weight_type="mean"):
    """Pure-JAX reference mirroring the PyTorch module, for validation."""
    pred = pred.astype(jnp.float32)
    target = target.astype(jnp.float32)
    if weight_type == "mean":
        w = jnp.ones((1, NUM_CLASSES), dtype=jnp.float32) / NUM_CLASSES
    elif weight_type == "static":
        w = _STATIC_WEIGHTS[None]
    else:
        stats = jnp.sum(target, axis=0, keepdims=True)
        w = jnp.where(stats != 0.0, 1.0 / jnp.log(stats + 1.2),
                      jnp.float32(1e-4))
    return jnp.sum((pred - target) ** 2 * w)


if __name__ == "__main__":
    key = jax.random.PRNGKey(0)
    k1, k2, k3, k4 = jax.random.split(key, 4)
    ok = True

    # Small batch (single grid step), all three weight modes, f32.
    batch = 8
    pred = jax.random.normal(k1, (batch, NUM_CLASSES), dtype=jnp.float32)
    target = (jax.random.uniform(k2, (batch, NUM_CLASSES)) > 0.7).astype(jnp.float32)
    for wt in ("mean", "static", "dynamic"):
        loss = jax.block_until_ready(discrete_loss(pred, target, weight_type=wt))
        ref = _reference_loss(pred, target, weight_type=wt)
        if not jnp.allclose(loss, ref, rtol=1e-4, atol=1e-4):
            ok = False
            print(f"MISMATCH (batch={batch}, {wt}): kernel={loss} ref={ref}")

    # Multi-step grid + ragged-batch padding: 600 rows -> 10 packed rows,
    # max_tile_rows=8 forces a grid of 2 and exercises row padding.
    batch2 = 600
    pred2 = jax.random.normal(k3, (batch2, NUM_CLASSES), dtype=jnp.float32)
    target2 = (jax.random.uniform(k4, (batch2, NUM_CLASSES)) > 0.7).astype(jnp.float32)
    for wt in ("mean", "static", "dynamic"):
        loss = jax.block_until_ready(
            discrete_loss(pred2, target2, weight_type=wt, max_tile_rows=8))
        ref = _reference_loss(pred2, target2, weight_type=wt)
        if not jnp.allclose(loss, ref, rtol=1e-4, atol=1e-4):
            ok = False
            print(f"MISMATCH (batch={batch2}, {wt}): kernel={loss} ref={ref}")

    # bf16 inputs: stay bf16 through the DMA, upcast in-kernel ((16,128) path).
    pred3 = pred.astype(jnp.bfloat16)
    target3 = target.astype(jnp.bfloat16)
    loss = jax.block_until_ready(discrete_loss(pred3, target3, weight_type="mean"))
    ref = _reference_loss(pred3, target3, weight_type="mean")
    if not jnp.allclose(loss, ref, rtol=1e-3, atol=1e-3):
        ok = False
        print(f"MISMATCH (bf16, mean): kernel={loss} ref={ref}")

    if ok:
        print("KERNEL_OK")
</pallas_src>

<mosaic_0001>
module attributes {stable_mosaic.version = 11 : i64} {
  func.func @_discrete_loss_kernel(%arg0: i32, %arg1: memref<8x1664xf32, #tpu.memory_space<vmem>>, %arg2: memref<8x1664xf32, #tpu.memory_space<vmem>>, %arg3: memref<1x8x1664xf32, #tpu.memory_space<vmem>>, %arg4: memref<1x8x1664xf32, #tpu.memory_space<vmem>>) attributes {dimension_semantics = [#tpu.dimension_semantics<parallel>], iteration_bounds = array<i64: 1>, scalar_prefetch = 0 : i64, scratch_operands = 0 : i64, tpu.core_type = #tpu.core_type<tc>, window_params = [{transform_indices = @transform_0, window_bounds = array<i64: 8, 1664>}, {transform_indices = @transform_1, window_bounds = array<i64: 8, 1664>}, {transform_indices = @transform_2, window_bounds = array<i64: 1, 8, 1664>}, {transform_indices = @transform_3, window_bounds = array<i64: 1, 8, 1664>}]} {
    %c0 = arith.constant 0 : index
    %c0_0 = arith.constant 0 : index
    %0 = vector.load %arg1[%c0, %c0_0] : memref<8x1664xf32, #tpu.memory_space<vmem>>, vector<8x1664xf32>
    %c0_1 = arith.constant 0 : index
    %c0_2 = arith.constant 0 : index
    %1 = vector.load %arg2[%c0_1, %c0_2] : memref<8x1664xf32, #tpu.memory_space<vmem>>, vector<8x1664xf32>
    %2 = arith.subf %0, %1 : vector<8x1664xf32>
    %3 = arith.mulf %2, %2 : vector<8x1664xf32>
    %4 = vector.shape_cast %3 : vector<8x1664xf32> to vector<1x8x1664xf32>
    %cst = arith.constant dense<0.000000e+00> : vector<8x1664xf32>
    %5 = vector.multi_reduction <add>, %4, %cst [0] : vector<1x8x1664xf32> to vector<8x1664xf32>
    %c0_3 = arith.constant 0 : index
    %c0_4 = arith.constant 0 : index
    %c0_5 = arith.constant 0 : index
    %6 = vector.load %arg3[%c0_3, %c0_4, %c0_5] : memref<1x8x1664xf32, #tpu.memory_space<vmem>>, vector<1x8x1664xf32>
    %7 = vector.shape_cast %6 : vector<1x8x1664xf32> to vector<8x1664xf32>
    %8 = vector.shape_cast %5 : vector<8x1664xf32> to vector<1x8x1664xf32>
    tpu.vector_store %arg3[%c0_3, %c0_4, %c0_5], %8 {strides = array<i32>} : memref<1x8x1664xf32, #tpu.memory_space<vmem>>, vector<1x8x1664xf32>,
    %9 = vector.shape_cast %1 : vector<8x1664xf32> to vector<1x8x1664xf32>
    %cst_6 = arith.constant dense<0.000000e+00> : vector<8x1664xf32>
    %10 = vector.multi_reduction <add>, %9, %cst_6 [0] : vector<1x8x1664xf32> to vector<8x1664xf32>
    %c0_7 = arith.constant 0 : index
    %c0_8 = arith.constant 0 : index
    %c0_9 = arith.constant 0 : index
    %11 = vector.load %arg4[%c0_7, %c0_8, %c0_9] : memref<1x8x1664xf32, #tpu.memory_space<vmem>>, vector<1x8x1664xf32>
    %12 = vector.shape_cast %11 : vector<1x8x1664xf32> to vector<8x1664xf32>
    %13 = vector.shape_cast %10 : vector<8x1664xf32> to vector<1x8x1664xf32>
    tpu.vector_store %arg4[%c0_7, %c0_8, %c0_9], %13 {strides = array<i32>} : memref<1x8x1664xf32, #tpu.memory_space<vmem>>, vector<1x8x1664xf32>,
    return
  }
  func.func @transform_0(%arg0: i32) -> (i32, i32) {
    %c0_i32 = arith.constant 0 : i32
    %c0_i32_0 = arith.constant 0 : i32
    return %arg0, %c0_i32 : i32, i32
  }
  func.func @transform_1(%arg0: i32) -> (i32, i32) {
    %c0_i32 = arith.constant 0 : i32
    %c0_i32_0 = arith.constant 0 : i32
    return %arg0, %c0_i32 : i32, i32
  }
  func.func @transform_2(%arg0: i32) -> (i32, i32, i32) {
    %c0_i32 = arith.constant 0 : i32
    %c0_i32_0 = arith.constant 0 : i32
    %c0_i32_1 = arith.constant 0 : i32
    return %arg0, %c0_i32, %c0_i32_0 : i32, i32, i32
  }
  func.func @transform_3(%arg0: i32) -> (i32, i32, i32) {
    %c0_i32 = arith.constant 0 : i32
    %c0_i32_0 = arith.constant 0 : i32
    %c0_i32_1 = arith.constant 0 : i32
    return %arg0, %c0_i32, %c0_i32_0 : i32, i32, i32
  }
}

</mosaic_0001>

<llo_original>
// kernel: tpu_custom_call.1
$region0: #{tpu_custom_call.1}
  #allocation0 [shape = 'u32[]', space=smem, size = 0x4, offset = 0x4, fixed_abs, tag = 'smem constant byte address 0x4 - core index']
  #allocation1 [shape = 'u32[144,128]{1,0:T(1,128)}', space=vmem, size = 0x12000, scoped, tag = 'internal scratch']
  %s0 = inlined_call_operand.hbm [shape: f32[8,1664], index: 0, kind: input, shape index: {}]
  %s1 = inlined_call_operand.hbm [shape: f32[8,1664], index: 1, kind: input, shape index: {}]
  %s2 = inlined_call_operand.hbm [shape: f32[1,8,1664], index: 2, kind: output, shape index: {0}]
  %s3 = inlined_call_operand.hbm [shape: f32[1,8,1664], index: 3, kind: output, shape index: {1}]
  %4 = xla_tuple %s2, %s3
  %s5 = sld [smem:[#allocation0]]
  $region34: #{tpu_custom_call.1} parent=0
    _
  %s7 = ssub.s32 1, %s5
  %s8 = scalar_select 0, %s7, %s5
  $region1: #{tpu_custom_call.1} parent=0
    #allocation2 [shape = 'u8[53248]{0}', space=vmem, size = 0xd000, scoped, tag = 'input window, operand 0, single buffered']
    #allocation3 [shape = 's32[1]{0}', space=sflag, size = 0x4, scoped, tag = 'scoped memory for tpu_custom_call.1']
    #allocation4 [shape = 's32[1]{0}', space=sflag, size = 0x4, scoped, tag = 'scoped memory for tpu_custom_call.1']
    #allocation5 [shape = 'u8[53248]{0}', space=vmem, size = 0xd000, scoped, tag = 'input window, operand 1, single buffered']
    #allocation6 [shape = 's32[1]{0}', space=sflag, size = 0x4, scoped, tag = 'scoped memory for tpu_custom_call.1']
    #allocation7 [shape = 'u8[53248]{0}', space=vmem, size = 0xd000, scoped, tag = 'output window, operand 0, single buffered']
    #allocation8 [shape = 'u8[53248]{0}', space=vmem, size = 0xd000, scoped, tag = 'output window, operand 1, single buffered']
    #allocation9 [shape = 's32[1]{0}', space=sflag, size = 0x4, scoped, tag = 'scoped memory for tpu_custom_call.1']
    %9 = vsyncpa [#allocation3], 0
    %10 = vsyncpa [#allocation6], 0
    %11 = vsyncpa [#allocation4], 0
    %12 = vsyncpa [#allocation9], 0
    // Predicated region
    $region2: #{tpu_custom_call.1} parent=1 // pred_check
      _
    $region3: #{tpu_custom_call.1} parent=1 // pred_check_branch
      %14 = sbr.rel (0) target = $region5
    $region4: #{tpu_custom_call.1} parent=1 // pred_region
      %s16 = ssub.s32 1664, 1664
      %17 = vsyncadd [#allocation3], %s16
      %s19 = sshll.u32 [#allocation2], 4
      %s20 = int_to_ptr.vmem [resolvable:$true] %s19
      %22 = dma.hbm_to_vmem [thread:$0]  %s0, 1664, %s20, [#allocation3]
    $region5: #{tpu_custom_call.1} parent=1 // pred_fallthru
      _
    // Predicated region
    $region6: #{tpu_custom_call.1} parent=1 // pred_check
      _
    $region7: #{tpu_custom_call.1} parent=1 // pred_check_branch
      %24 = sbr.rel (0) target = $region9
    $region8: #{tpu_custom_call.1} parent=1 // pred_region
      %s26 = ssub.s32 1664, 1664
      %27 = vsyncadd [#allocation6], %s26
      %s29 = sshll.u32 [#allocation5], 4
      %s30 = int_to_ptr.vmem [resolvable:$true] %s29
      %32 = dma.hbm_to_vmem [thread:$0]  %s1, 1664, %s30, [#allocation6]
    $region9: #{tpu_custom_call.1} parent=1 // pred_fallthru
      _
    // Predicated region
    $region10: #{tpu_custom_call.1} parent=1 // pred_check
      _
    $region11: #{tpu_custom_call.1} parent=1 // pred_check_branch
      %34 = sbr.rel (0) target = $region13
    $region12: #{tpu_custom_call.1} parent=1 // pred_region
      %35 = dma.done [#allocation3], 1664
    $region13: #{tpu_custom_call.1} parent=1 // pred_fallthru
      _
    // Predicated region
    $region14: #{tpu_custom_call.1} parent=1 // pred_check
      _
    $region15: #{tpu_custom_call.1} parent=1 // pred_check_branch
      %37 = sbr.rel (0) target = $region17
    $region16: #{tpu_custom_call.1} parent=1 // pred_region
      %38 = dma.done [#allocation6], 1664
    $region17: #{tpu_custom_call.1} parent=1 // pred_fallthru
      _
    %v39 = vld [vmem:[#allocation2] sm:$0xff]
    %v40 = vld [vmem:[#allocation2 + $0x8] sm:$0xff]
    %v41 = vld [vmem:[#allocation2 + $0x10] sm:$0xff]
    %v42 = vld [vmem:[#allocation2 + $0x18] sm:$0xff]
    %v43 = vld [vmem:[#allocation2 + $0x20] sm:$0xff]
    %v44 = vld [vmem:[#allocation2 + $0x28] sm:$0xff]
    %v45 = vld [vmem:[#allocation2 + $0x30] sm:$0xff]
    %v46 = vld [vmem:[#allocation2 + $0x38] sm:$0xff]
    %v47 = vld [vmem:[#allocation2 + $0x40] sm:$0xff]
    %v48 = vld [vmem:[#allocation2 + $0x48] sm:$0xff]
    %v49 = vld [vmem:[#allocation2 + $0x50] sm:$0xff]
    %v50 = vld [vmem:[#allocation2 + $0x58] sm:$0xff]
    %v51 = vld [vmem:[#allocation2 + $0x60] sm:$0xff]
    %v52 = vld [vmem:[#allocation5] sm:$0xff]
    %v53 = vld [vmem:[#allocation5 + $0x8] sm:$0xff]
    %v54 = vld [vmem:[#allocation5 + $0x10] sm:$0xff]
    %v55 = vld [vmem:[#allocation5 + $0x18] sm:$0xff]
    %v56 = vld [vmem:[#allocation5 + $0x20] sm:$0xff]
    %v57 = vld [vmem:[#allocation5 + $0x28] sm:$0xff]
    %v58 = vld [vmem:[#allocation5 + $0x30] sm:$0xff]
    %v59 = vld [vmem:[#allocation5 + $0x38] sm:$0xff]
    %v60 = vld [vmem:[#allocation5 + $0x40] sm:$0xff]
    %v61 = vld [vmem:[#allocation5 + $0x48] sm:$0xff]
    %v62 = vld [vmem:[#allocation5 + $0x50] sm:$0xff]
    %v63 = vld [vmem:[#allocation5 + $0x58] sm:$0xff]
    %v64 = vld [vmem:[#allocation5 + $0x60] sm:$0xff]
    %v65 = vsub.f32 %v39, %v52
    %v66 = vsub.f32 %v40, %v53
    %v67 = vsub.f32 %v41, %v54
    %v68 = vsub.f32 %v42, %v55
    %v69 = vsub.f32 %v43, %v56
    %v70 = vsub.f32 %v44, %v57
    %v71 = vsub.f32 %v45, %v58
    %v72 = vsub.f32 %v46, %v59
    %v73 = vsub.f32 %v47, %v60
    %v74 = vsub.f32 %v48, %v61
    %v75 = vsub.f32 %v49, %v62
    %v76 = vsub.f32 %v50, %v63
    %v77 = vsub.f32 %v51, %v64
    %v78 = vmul.f32 %v65, %v65
    %v79 = vmul.f32 %v66, %v66
    %v80 = vmul.f32 %v67, %v67
    %v81 = vmul.f32 %v68, %v68
    %v82 = vmul.f32 %v69, %v69
    %v83 = vmul.f32 %v70, %v70
    %v84 = vmul.f32 %v71, %v71
    %v85 = vmul.f32 %v72, %v72
    %v86 = vmul.f32 %v73, %v73
    %v87 = vmul.f32 %v74, %v74
    %v88 = vmul.f32 %v75, %v75
    %v89 = vmul.f32 %v76, %v76
    %v90 = vmul.f32 %v77, %v77
    %v91 = vadd.f32 %v78, 0.0
    %v92 = vadd.f32 %v79, 0.0
    %v93 = vadd.f32 %v80, 0.0
    %v94 = vadd.f32 %v81, 0.0
    %v95 = vadd.f32 %v82, 0.0
    %v96 = vadd.f32 %v83, 0.0
    %v97 = vadd.f32 %v84, 0.0
    %v98 = vadd.f32 %v85, 0.0
    %v99 = vadd.f32 %v86, 0.0
    %v100 = vadd.f32 %v87, 0.0
    %v101 = vadd.f32 %v88, 0.0
    %v102 = vadd.f32 %v89, 0.0
    %v103 = vadd.f32 %v90, 0.0
    %104 = vst [vmem:[#allocation7] sm:$0xff] %v91
    %105 = vst [vmem:[#allocation7 + $0x8] sm:$0xff] %v92
    %106 = vst [vmem:[#allocation7 + $0x10] sm:$0xff] %v93
    %107 = vst [vmem:[#allocation7 + $0x18] sm:$0xff] %v94
    %108 = vst [vmem:[#allocation7 + $0x20] sm:$0xff] %v95
    %109 = vst [vmem:[#allocation7 + $0x28] sm:$0xff] %v96
    %110 = vst [vmem:[#allocation7 + $0x30] sm:$0xff] %v97
    %111 = vst [vmem:[#allocation7 + $0x38] sm:$0xff] %v98
    %112 = vst [vmem:[#allocation7 + $0x40] sm:$0xff] %v99
    %113 = vst [vmem:[#allocation7 + $0x48] sm:$0xff] %v100
    %114 = vst [vmem:[#allocation7 + $0x50] sm:$0xff] %v101
    %115 = vst [vmem:[#allocation7 + $0x58] sm:$0xff] %v102
    %116 = vst [vmem:[#allocation7 + $0x60] sm:$0xff] %v103
    %v117 = vadd.f32 %v52, 0.0
    %v118 = vadd.f32 %v53, 0.0
    %v119 = vadd.f32 %v54, 0.0
    %v120 = vadd.f32 %v55, 0.0
    %v121 = vadd.f32 %v56, 0.0
    %v122 = vadd.f32 %v57, 0.0
    %v123 = vadd.f32 %v58, 0.0
    %v124 = vadd.f32 %v59, 0.0
    %v125 = vadd.f32 %v60, 0.0
    %v126 = vadd.f32 %v61, 0.0
    %v127 = vadd.f32 %v62, 0.0
    %v128 = vadd.f32 %v63, 0.0
    %v129 = vadd.f32 %v64, 0.0
    %130 = vst [vmem:[#allocation8] sm:$0xff] %v117
    %131 = vst [vmem:[#allocation8 + $0x8] sm:$0xff] %v118
    %132 = vst [vmem:[#allocation8 + $0x10] sm:$0xff] %v119
    %133 = vst [vmem:[#allocation8 + $0x18] sm:$0xff] %v120
    %134 = vst [vmem:[#allocation8 + $0x20] sm:$0xff] %v121
    %135 = vst [vmem:[#allocation8 + $0x28] sm:$0xff] %v122
    %136 = vst [vmem:[#allocation8 + $0x30] sm:$0xff] %v123
    %137 = vst [vmem:[#allocation8 + $0x38] sm:$0xff] %v124
    %138 = vst [vmem:[#allocation8 + $0x40] sm:$0xff] %v125
    %139 = vst [vmem:[#allocation8 + $0x48] sm:$0xff] %v126
    %140 = vst [vmem:[#allocation8 + $0x50] sm:$0xff] %v127
    %141 = vst [vmem:[#allocation8 + $0x58] sm:$0xff] %v128
    %142 = vst [vmem:[#allocation8 + $0x60] sm:$0xff] %v129
    // Predicated region
    $region18: #{tpu_custom_call.1} parent=1 // pred_check
      _
    $region19: #{tpu_custom_call.1} parent=1 // pred_check_branch
      %144 = sbr.rel (0) target = $region21
    $region20: #{tpu_custom_call.1} parent=1 // pred_region
      %s146 = ssub.s32 1664, 1664
      %147 = vsyncadd [#allocation4], %s146
      %s149 = sshll.u32 [#allocation7], 4
      %s150 = int_to_ptr.vmem [resolvable:$true] %s149
      %152 = dma.vmem_to_hbm [thread:$0]  %s150, 1664, %s2, [#allocation4]
    $region21: #{tpu_custom_call.1} parent=1 // pred_fallthru
      _
    // Predicated region
    $region22: #{tpu_custom_call.1} parent=1 // pred_check
      _
    $region23: #{tpu_custom_call.1} parent=1 // pred_check_branch
      %154 = sbr.rel (0) target = $region25
    $region24: #{tpu_custom_call.1} parent=1 // pred_region
      %s156 = ssub.s32 1664, 1664
      %157 = vsyncadd [#allocation9], %s156
      %s159 = sshll.u32 [#allocation8], 4
      %s160 = int_to_ptr.vmem [resolvable:$true] %s159
      %162 = dma.vmem_to_hbm [thread:$0]  %s160, 1664, %s3, [#allocation9]
    $region25: #{tpu_custom_call.1} parent=1 // pred_fallthru
      _
    // Predicated region
    $region26: #{tpu_custom_call.1} parent=1 // pred_check
      _
    $region27: #{tpu_custom_call.1} parent=1 // pred_check_branch
      %164 = sbr.rel (0) target = $region29
    $region28: #{tpu_custom_call.1} parent=1 // pred_region
      %165 = dma.done [#allocation4], 1664
    $region29: #{tpu_custom_call.1} parent=1 // pred_fallthru
      _
    // Predicated region
    $region30: #{tpu_custom_call.1} parent=1 // pred_check
      _
    $region31: #{tpu_custom_call.1} parent=1 // pred_check_branch
      %167 = sbr.rel (0) target = $region33
    $region32: #{tpu_custom_call.1} parent=1 // pred_region
      %168 = dma.done [#allocation9], 1664
    $region33: #{tpu_custom_call.1} parent=1 // pred_fallthru
      _
    %169 = vsyncpa [#allocation3], 1
    %170 = vsyncpa [#allocation6], 1
    %171 = vsyncpa [#allocation4], 1
    %172 = vsyncpa [#allocation9], 1

</llo_original>
